<compile_context>
chip_gen: v7x
topology: tpu7x:2x2x1
jax: 0.10.0
libtpu: 0.0.40
codegen_flags: <defaults>
</compile_context>

<pallas_src>
import functools

import jax
import jax.numpy as jnp
from jax.experimental import pallas as pl
from jax.experimental.pallas import tpu as pltpu

EPS = 1e-5


# --------------------------------------------------------------------------- #
# Pallas kernels
# --------------------------------------------------------------------------- #
def _stats_kernel(x_ref, st_ref):
    """Per-channel partial sum / sum-of-squares of one row tile (for bn1 on the input)."""
    x = x_ref[...].astype(jnp.float32)                       # (tm, C)
    st_ref[0, 0:1, :] = jnp.sum(x, axis=0, keepdims=True)
    st_ref[0, 1:2, :] = jnp.sum(x * x, axis=0, keepdims=True)


def _bn_conv1_kernel(x_ref, s_ref, b_ref, w_ref, *out_refs, planes, has_sc):
    """Fused relu(bn1(x)) @ [w1 | wsc]  +  partial batch stats of the conv1 columns."""
    a = jnp.maximum(x_ref[...] * s_ref[...] + b_ref[...], 0.0)          # (tm, Cin) f32
    y = jnp.dot(a.astype(jnp.bfloat16), w_ref[...],
                preferred_element_type=jnp.float32)                     # (tm, planes[+Cexp])
    c1 = y[:, :planes]
    if has_sc:
        c1_ref, sc_ref, st_ref = out_refs
        sc_ref[...] = y[:, planes:].astype(sc_ref.dtype)
    else:
        c1_ref, st_ref = out_refs
    c1_ref[...] = c1.astype(c1_ref.dtype)
    # partial stats for bn2 (bn2 only sees the conv1 output, not the shortcut columns)
    st_ref[0, 0:1, :] = jnp.sum(c1, axis=0, keepdims=True)
    st_ref[0, 1:2, :] = jnp.sum(c1 * c1, axis=0, keepdims=True)


def _bn_conv2_kernel(x_ref, s_ref, b_ref, w_ref, sel_ref, o_ref, st_ref, pad_ref,
                     *, stride, Ho, Wo):
    """Fused relu(bn2(c1)) -> 3x3 stride-s conv (padding=1) + partial batch stats.

    x_ref   : (1, H, W, Cin)       bf16
    w_ref   : (3, Cin, 3*Cout)     bf16   (w2k[ky, ci, kx*Cout+co] = w2[ky,kx,ci,co])
    sel_ref : (3, Wo, W+2)         bf16   0/1 column-selection: sel[kx,ox,x]=1 iff x==kx+s*ox
    pad_ref : (H+2, W+2, Cin)      bf16   VMEM scratch, zero-padded activation
    """
    H, W = x_ref.shape[1], x_ref.shape[2]
    Cout = w_ref.shape[2] // 3

    # BN + ReLU (padding must be applied AFTER the activation, so pad lives in VMEM).
    a = jnp.maximum(x_ref[0].astype(jnp.float32) * s_ref[...] + b_ref[...], 0.0)
    pad_ref[...] = jnp.zeros_like(pad_ref)
    pad_ref[1:H + 1, 1:W + 1, :] = a.astype(pad_ref.dtype)

    w_all = w_ref[...]                       # (3, Cin, 3*Cout) bf16
    sel = sel_ref[...]                       # (3, Wo, W+2)     bf16

    ssum = jnp.zeros((1, Cout), jnp.float32)
    ssq = jnp.zeros((1, Cout), jnp.float32)
    for oy in range(Ho):                     # static unroll over output rows
        # one K = 3*Cin matmul per kernel-row of this output row's band
        inner = jnp.zeros((W + 2, 3 * Cout), jnp.float32)
        for ky in range(3):
            r = pad_ref[oy * stride + ky]                           # (W+2, Cin) bf16
            inner = inner + jnp.dot(r, w_all[ky],
                                    preferred_element_type=jnp.float32)
        # strided column selection of each kx tap, done as a tiny 0/1 matmul on the MXU
        acc = jnp.zeros((Wo, Cout), jnp.float32)
        for kx in range(3):
            acc = acc + jnp.dot(
                sel[kx],
                inner[:, kx * Cout:(kx + 1) * Cout].astype(jnp.bfloat16),
                preferred_element_type=jnp.float32)
        o_ref[0, oy] = acc.astype(o_ref.dtype)
        ssum = ssum + jnp.sum(acc, axis=0, keepdims=True)
        ssq = ssq + jnp.sum(acc * acc, axis=0, keepdims=True)

    # partial stats for bn3
    st_ref[0, 0:1, :] = ssum
    st_ref[0, 1:2, :] = ssq


def _bn_conv3_add_kernel(x_ref, s_ref, b_ref, w_ref, r_ref, o_ref):
    """Fused relu(bn3(c2)) @ w3 + shortcut."""
    a = jnp.maximum(x_ref[...].astype(jnp.float32) * s_ref[...] + b_ref[...], 0.0)
    y = jnp.dot(a.astype(jnp.bfloat16), w_ref[...],
                preferred_element_type=jnp.float32)
    o_ref[...] = y + r_ref[...].astype(jnp.float32)


# --------------------------------------------------------------------------- #
# Wrappers (BlockSpecs / grids / tiny per-channel glue)
# --------------------------------------------------------------------------- #
def _pick_rows(M, C, *, budget_bytes=4 << 20, min_steps=2):
    """Largest row tile (multiple of 8, dividing M) within a VMEM budget, keeping at
    least `min_steps` grid steps so both v7x TensorCores get work."""
    limit = min(M, max(8, M // min_steps), max(8, budget_bytes // max(4 * C, 1)))
    for t in range(limit, 7, -1):
        if M % t == 0 and t % 8 == 0:
            return t
    return M


def _fold_bn(sums, count, gamma, beta):
    """Fold batch mean / biased variance into a per-channel scale / bias (tiny glue)."""
    mean = sums[0] / count
    var = sums[1] / count - mean * mean   # note: E[x^2]-E[x]^2 in f32 (means ~0 here)
    scale = gamma * jax.lax.rsqrt(var + EPS)
    bias = beta - mean * scale
    return scale.reshape(1, -1).astype(jnp.float32), bias.reshape(1, -1).astype(jnp.float32)


def _stats_pass(x2d):
    """Per-channel (sum, sum_sq) of an (M, C) slab; per-tile partials, reduced in wrapper."""
    M, C = x2d.shape
    tm = _pick_rows(M, C)
    G = M // tm
    part = pl.pallas_call(
        _stats_kernel,
        out_shape=jax.ShapeDtypeStruct((G, 2, C), jnp.float32),
        grid=(G,),
        in_specs=[pl.BlockSpec((tm, C), lambda i: (i, 0))],
        out_specs=pl.BlockSpec((1, 2, C), lambda i: (i, 0, 0)),
        compiler_params=pltpu.CompilerParams(dimension_semantics=("parallel",)),
    )(x2d)
    return jnp.sum(part, axis=0)                          # (2, C)


def _bn_conv1(x2d, scale, bias, wcat_bf16, planes, has_sc):
    M, Cin = x2d.shape
    Ktot = wcat_bf16.shape[1]
    tm = _pick_rows(M, max(Cin, Ktot))
    G = M // tm

    out_shape = [jax.ShapeDtypeStruct((M, planes), jnp.bfloat16)]
    out_specs = [pl.BlockSpec((tm, planes), lambda i: (i, 0))]
    if has_sc:
        out_shape.append(jax.ShapeDtypeStruct((M, Ktot - planes), jnp.bfloat16))
        out_specs.append(pl.BlockSpec((tm, Ktot - planes), lambda i: (i, 0)))
    out_shape.append(jax.ShapeDtypeStruct((G, 2, planes), jnp.float32))
    out_specs.append(pl.BlockSpec((1, 2, planes), lambda i: (i, 0, 0)))

    outs = pl.pallas_call(
        functools.partial(_bn_conv1_kernel, planes=planes, has_sc=has_sc),
        out_shape=tuple(out_shape),
        grid=(G,),
        in_specs=[
            pl.BlockSpec((tm, Cin), lambda i: (i, 0)),
            pl.BlockSpec((1, Cin), lambda i: (0, 0)),
            pl.BlockSpec((1, Cin), lambda i: (0, 0)),
            pl.BlockSpec((Cin, Ktot), lambda i: (0, 0)),
        ],
        out_specs=tuple(out_specs),
        compiler_params=pltpu.CompilerParams(dimension_semantics=("parallel",)),
    )(x2d, scale, bias, wcat_bf16)

    if has_sc:
        c1, sc, st = outs
    else:
        c1, st = outs
        sc = None
    return c1, sc, jnp.sum(st, axis=0)


def _bn_conv2(c1_nhwc, scale, bias, w2k_bf16, sel_bf16, stride):
    N, H, W, Cin = c1_nhwc.shape
    Cout = w2k_bf16.shape[2] // 3
    Ho = (H - 1) // stride + 1
    Wo = (W - 1) // stride + 1
    kern = functools.partial(_bn_conv2_kernel, stride=stride, Ho=Ho, Wo=Wo)
    c2, st = pl.pallas_call(
        kern,
        out_shape=(jax.ShapeDtypeStruct((N, Ho, Wo, Cout), jnp.bfloat16),
                   jax.ShapeDtypeStruct((N, 2, Cout), jnp.float32)),
        grid=(N,),
        in_specs=[
            pl.BlockSpec((1, H, W, Cin), lambda n: (n, 0, 0, 0)),
            pl.BlockSpec((1, Cin), lambda n: (0, 0)),
            pl.BlockSpec((1, Cin), lambda n: (0, 0)),
            pl.BlockSpec((3, Cin, 3 * Cout), lambda n: (0, 0, 0)),
            pl.BlockSpec((3, Wo, W + 2), lambda n: (0, 0, 0)),
        ],
        out_specs=(pl.BlockSpec((1, Ho, Wo, Cout), lambda n: (n, 0, 0, 0)),
                   pl.BlockSpec((1, 2, Cout), lambda n: (n, 0, 0))),
        scratch_shapes=[pltpu.VMEM((H + 2, W + 2, Cin), jnp.bfloat16)],
        compiler_params=pltpu.CompilerParams(dimension_semantics=("parallel",)),
    )(c1_nhwc, scale, bias, w2k_bf16, sel_bf16)
    # TODO(synk): for ResNet-scale images, additionally tile conv2 spatially (halo blocks)
    # so the padded-image scratch stays well under v5e/v7x VMEM limits.
    return c2, jnp.sum(st, axis=0)


def _bn_conv3_add(x2d, scale, bias, w3_bf16, resid):
    M, Cin = x2d.shape
    Cout = w3_bf16.shape[1]
    tm = _pick_rows(M, max(Cin, Cout))
    G = M // tm
    return pl.pallas_call(
        _bn_conv3_add_kernel,
        out_shape=jax.ShapeDtypeStruct((M, Cout), jnp.float32),
        grid=(G,),
        in_specs=[
            pl.BlockSpec((tm, Cin), lambda i: (i, 0)),
            pl.BlockSpec((1, Cin), lambda i: (0, 0)),
            pl.BlockSpec((1, Cin), lambda i: (0, 0)),
            pl.BlockSpec((Cin, Cout), lambda i: (0, 0)),
            pl.BlockSpec((tm, Cout), lambda i: (i, 0)),
        ],
        out_specs=pl.BlockSpec((tm, Cout), lambda i: (i, 0)),
        compiler_params=pltpu.CompilerParams(dimension_semantics=("parallel",)),
    )(x2d, scale, bias, w3_bf16, resid)


# --------------------------------------------------------------------------- #
# PreActBottleneck forward (Pallas pipeline)
# --------------------------------------------------------------------------- #
def preact_bottleneck_forward(x_nchw, params, stride):
    x = jnp.transpose(x_nchw, (0, 2, 3, 1)).astype(jnp.float32)       # NHWC
    N, H, W, Cin = x.shape
    planes = params["w1"].shape[1]
    Cout = params["w3"].shape[1]                                       # expansion * planes
    has_shortcut = (stride != 1) or (Cin != Cout)
    Ho = (H - 1) // stride + 1
    Wo = (W - 1) // stride + 1
    M0 = N * H * W
    M1 = N * Ho * Wo
    x2d = x.reshape(M0, Cin)

    # --- bn1 batch stats (x has no producer kernel -> one dedicated reduction pass)
    st1 = _stats_pass(x2d)
    scale1, shift1 = _fold_bn(st1, M0, params["g1"], params["b1"])

    # --- fused bn1+relu -> conv1 (1x1) [+ 1x1 shortcut conv] + bn2 stats
    if has_shortcut:
        wcat = jnp.concatenate([params["w1"], params["wsc"]], axis=1)  # (Cin, planes+Cout)
    else:
        wcat = params["w1"]
    c1_2d, sc_full_2d, st2 = _bn_conv1(x2d, scale1, shift1,
                                       wcat.astype(jnp.bfloat16), planes, has_shortcut)
    scale2, shift2 = _fold_bn(st2, M0, params["g2"], params["b2"])

    if has_shortcut:
        # 1x1 conv with stride == spatial subsample of the stride-1 result (XLA glue slice)
        sc_2d = (sc_full_2d.reshape(N, H, W, Cout)[:, ::stride, ::stride, :]
                 .reshape(M1, Cout))
    else:
        sc_2d = x2d.astype(jnp.bfloat16)                               # identity shortcut

    # --- fused bn2+relu -> conv2 (3x3, stride, pad=1) + bn3 stats
    w2 = params["w2"]                                                  # (3, 3, planes, planes)
    w2k = (jnp.transpose(w2, (0, 2, 1, 3))
           .reshape(3, planes, 3 * planes).astype(jnp.bfloat16))       # (3, Cin, 3*Cout)
    sel = (jnp.arange(W + 2)[None, None, :]
           == (jnp.arange(3)[:, None, None]
               + stride * jnp.arange(Wo)[None, :, None])).astype(jnp.bfloat16)
    c1 = c1_2d.reshape(N, H, W, planes)
    c2, st3 = _bn_conv2(c1, scale2, shift2, w2k, sel, stride)
    scale3, shift3 = _fold_bn(st3, M1, params["g3"], params["b3"])

    # --- fused bn3+relu -> conv3 (1x1) + residual add
    out2d = _bn_conv3_add(c2.reshape(M1, planes), scale3, shift3,
                          params["w3"].astype(jnp.bfloat16), sc_2d)
    out = out2d.reshape(N, Ho, Wo, Cout)
    return jnp.transpose(out, (0, 3, 1, 2))                            # back to NCHW


# --------------------------------------------------------------------------- #
# Pure-JAX f32 reference (correctness check only)
# --------------------------------------------------------------------------- #
def reference_forward(x_nchw, params, stride):
    x = jnp.transpose(x_nchw, (0, 2, 3, 1)).astype(jnp.float32)

    def bn(v, g, b):
        mean = jnp.mean(v, axis=(0, 1, 2))
        var = jnp.var(v, axis=(0, 1, 2))
        return (v - mean) / jnp.sqrt(var + EPS) * g + b

    relu = lambda v: jnp.maximum(v, 0.0)
    Cin = x.shape[-1]
    Cout = params["w3"].shape[1]
    has_shortcut = (stride != 1) or (Cin != Cout)

    out1 = relu(bn(x, params["g1"], params["b1"]))
    if has_shortcut:
        shortcut = jnp.einsum("nhwc,cd->nhwd",
                              out1[:, ::stride, ::stride, :], params["wsc"])
    else:
        shortcut = x
    c1 = jnp.einsum("nhwc,cd->nhwd", out1, params["w1"])
    a2 = relu(bn(c1, params["g2"], params["b2"]))
    c2 = jax.lax.conv_general_dilated(
        a2, params["w2"], window_strides=(stride, stride),
        padding=((1, 1), (1, 1)),
        dimension_numbers=("NHWC", "HWIO", "NHWC"))
    a3 = relu(bn(c2, params["g3"], params["b3"]))
    out = jnp.einsum("nhwc,cd->nhwd", a3, params["w3"]) + shortcut
    return jnp.transpose(out, (0, 3, 1, 2))


# --------------------------------------------------------------------------- #
if __name__ == "__main__":
    # N=2, in_planes=16, planes=8, stride=2, H=W=16  ->  output (2, 32, 8, 8).
    N, in_planes, planes, stride, H, W = 2, 16, 8, 2, 16, 16
    expansion = 4

    key = jax.random.PRNGKey(0)
    ks = jax.random.split(key, 11)
    params = {
        # conv weights stored matmul-ready: (Cin, Cout) for 1x1, HWIO for the 3x3
        "w1": 0.1 * jax.random.normal(ks[0], (in_planes, planes), jnp.float32),
        "w2": 0.1 * jax.random.normal(ks[1], (3, 3, planes, planes), jnp.float32),
        "w3": 0.1 * jax.random.normal(ks[2], (planes, expansion * planes), jnp.float32),
        "wsc": 0.1 * jax.random.normal(ks[3], (in_planes, expansion * planes), jnp.float32),
        "g1": 1.0 + 0.1 * jax.random.normal(ks[4], (in_planes,), jnp.float32),
        "b1": 0.1 * jax.random.normal(ks[5], (in_planes,), jnp.float32),
        "g2": 1.0 + 0.1 * jax.random.normal(ks[6], (planes,), jnp.float32),
        "b2": 0.1 * jax.random.normal(ks[7], (planes,), jnp.float32),
        "g3": 1.0 + 0.1 * jax.random.normal(ks[8], (planes,), jnp.float32),
        "b3": 0.1 * jax.random.normal(ks[9], (planes,), jnp.float32),
    }
    x = jax.random.normal(ks[10], (N, in_planes, H, W), jnp.float32)   # NCHW input

    out = jax.block_until_ready(preact_bottleneck_forward(x, params, stride))
    ref = jax.block_until_ready(reference_forward(x, params, stride))

    assert out.shape == (N, expansion * planes, H // stride, W // stride), out.shape
    # Tolerance accounts for bf16 MXU operands / bf16 inter-stage activations
    # (per perf feedback); all accumulation and BN math is f32.
    max_err = float(jnp.max(jnp.abs(out - ref)))
    assert jnp.allclose(out, ref, rtol=5e-2, atol=5e-2), max_err

    print("KERNEL_OK")
</pallas_src>

<mosaic_0001>
module attributes {stable_mosaic.version = 11 : i64} {
  func.func @_stats_kernel(%arg0: i32, %arg1: memref<256x16xf32, #tpu.memory_space<vmem>>, %arg2: memref<1x2x16xf32, #tpu.memory_space<vmem>>) attributes {dimension_semantics = [#tpu.dimension_semantics<parallel>], iteration_bounds = array<i64: 2>, scalar_prefetch = 0 : i64, scratch_operands = 0 : i64, tpu.core_type = #tpu.core_type<tc>, window_params = [{transform_indices = @transform_0, window_bounds = array<i64: 256, 16>}, {transform_indices = @transform_1, window_bounds = array<i64: 1, 2, 16>}]} {
    %c0 = arith.constant 0 : index
    %c0_0 = arith.constant 0 : index
    %0 = vector.load %arg1[%c0, %c0_0] : memref<256x16xf32, #tpu.memory_space<vmem>>, vector<256x16xf32>
    %cst = arith.constant dense<0.000000e+00> : vector<16xf32>
    %1 = vector.multi_reduction <add>, %0, %cst [0] : vector<256x16xf32> to vector<16xf32>
    %2 = vector.shape_cast %1 : vector<16xf32> to vector<1x16xf32>
    %c0_1 = arith.constant 0 : index
    %c0_2 = arith.constant 0 : index
    %c0_3 = arith.constant 0 : index
    %3 = vector.load %arg2[%c0_1, %c0_2, %c0_3] : memref<1x2x16xf32, #tpu.memory_space<vmem>>, vector<1x1x16xf32>
    %4 = vector.shape_cast %3 : vector<1x1x16xf32> to vector<1x16xf32>
    %5 = vector.shape_cast %2 : vector<1x16xf32> to vector<1x1x16xf32>
    tpu.vector_store %arg2[%c0_1, %c0_2, %c0_3], %5 {strides = array<i32>} : memref<1x2x16xf32, #tpu.memory_space<vmem>>, vector<1x1x16xf32>,
    %6 = arith.mulf %0, %0 : vector<256x16xf32>
    %cst_4 = arith.constant dense<0.000000e+00> : vector<16xf32>
    %7 = vector.multi_reduction <add>, %6, %cst_4 [0] : vector<256x16xf32> to vector<16xf32>
    %8 = vector.shape_cast %7 : vector<16xf32> to vector<1x16xf32>
    %c0_5 = arith.constant 0 : index
    %c1 = arith.constant 1 : index
    %c0_6 = arith.constant 0 : index
    %9 = vector.load %arg2[%c0_5, %c1, %c0_6] : memref<1x2x16xf32, #tpu.memory_space<vmem>>, vector<1x1x16xf32>
    %10 = vector.shape_cast %9 : vector<1x1x16xf32> to vector<1x16xf32>
    %11 = vector.shape_cast %8 : vector<1x16xf32> to vector<1x1x16xf32>
    tpu.vector_store %arg2[%c0_5, %c1, %c0_6], %11 {strides = array<i32>} : memref<1x2x16xf32, #tpu.memory_space<vmem>>, vector<1x1x16xf32>,
    return
  }
  func.func @transform_0(%arg0: i32) -> (i32, i32) {
    %c0_i32 = arith.constant 0 : i32
    %c0_i32_0 = arith.constant 0 : i32
    return %arg0, %c0_i32 : i32, i32
  }
  func.func @transform_1(%arg0: i32) -> (i32, i32, i32) {
    %c0_i32 = arith.constant 0 : i32
    %c0_i32_0 = arith.constant 0 : i32
    %c0_i32_1 = arith.constant 0 : i32
    return %arg0, %c0_i32, %c0_i32_0 : i32, i32, i32
  }
}

</mosaic_0001>

<llo_original>
// kernel: tpu_custom_call.1
$region0: #{tpu_custom_call.1}
  #allocation0 [shape = 'u32[]', space=smem, size = 0x4, offset = 0x4, fixed_abs, tag = 'smem constant byte address 0x4 - core index']
  #allocation1 [shape = 'u32[144,128]{1,0:T(1,128)}', space=vmem, size = 0x12000, scoped, tag = 'internal scratch']
  %s0 = inlined_call_operand.vmem [shape: f32[512,16], index: 0, kind: input, shape index: {}]
  %s1 = inlined_call_operand.hbm [shape: f32[2,2,16], index: 1, kind: output, shape index: {}]
  %s2 = sld [smem:[#allocation0]]
  $region37: #{tpu_custom_call.1} parent=0
    _
  %s4 = ssub.s32 1, %s2
  %s5 = scalar_select 0, %s4, %s2
  $region1: #{tpu_custom_call.1} parent=0
    #allocation2 [shape = 'u8[2048]{0}', space=vmem, size = 0x800, scoped, tag = 'output window, operand 0']
    #allocation3 [shape = 's32[2]{0}', space=sflag, size = 0x8, scoped, tag = 'scoped memory for tpu_custom_call.1']
    %6 = vsyncpa [#allocation3], 0
    %s7 = scalar_lea.sflag [#allocation3], 1
    %8 = vsyncpa %s7, 0
    loop: start=0, step=1, limit=4
    $region2: #{tpu_custom_call.1} parent=1 // loop_pre_header
      _
    $region3: #{tpu_custom_call.1} parent=1 // loop_header
      %s10 = sphi 0, %s14
      %p11 = scmp.ge.s32.totalorder %s10, 4
      %s20 = sphi 0, %s22
      %s23 = sphi 0, %s20
      %s24 = sphi 0, %s23
      %s40 = sphi 0, %s24
      %s46 = sphi 0, %s48
      %s49 = sphi 0, %s46
      %s50 = sphi 0, %s49
      %s66 = sphi 0, %s50
    $region4: #{tpu_custom_call.1} parent=1 // loop_header_branch
      %13 = sbr.rel (%p11) target = $region8
    $region5: #{tpu_custom_call.1} parent=1 // loop_body
      %s15 = ssub.s32 %s10, 1
      %s16 = ssub.s32 %s10, 2
      %s17 = sadd.s32 %s10, 1
      %s18 = ssub.s32 %s10, %s17
      %p19 = scmp.eq.s32.totalorder %s18, 0
      %s21 = sadd.s32 %s20, 1
      %s22 = scalar_select %p19, %s20, %s21
      %p25 = pneg %p19
      %p26 = scmp.eq.s32.totalorder %s10, 1
      %p27 = por %p25, %p26
      %p28 = scmp.ne.s32.totalorder %s20, %s23
      %p29 = scmp.eq.s32.totalorder %s10, 0
      %p30 = por %p28, %p29
      %p31 = scmp.ne.s32.totalorder %s20, %s23
      %p32 = scmp.eq.s32.totalorder %s15, 1
      %p33 = por %p31, %p32
      %p34 = scmp.ne.s32.totalorder %s23, %s24
      %p35 = scmp.eq.s32.totalorder %s15, 0
      %p36 = por %p34, %p35
      %p37 = scmp.ne.s32.totalorder %s23, %s24
      %p38 = scmp.eq.s32.totalorder %s16, 1
      %p39 = por %p37, %p38
      %p41 = scmp.ne.s32.totalorder %s24, %s40
      %p42 = scmp.eq.s32.totalorder %s16, 0
      %p43 = por %p41, %p42
      %s44 = ssub.s32 %s10, %s17
      %p45 = scmp.eq.s32.totalorder %s44, 0
      %s47 = sadd.s32 %s46, 1
      %s48 = scalar_select %p45, %s46, %s47
      %p51 = pneg %p45
      %p52 = scmp.eq.s32.totalorder %s10, 1
      %p53 = por %p51, %p52
      %p54 = scmp.ne.s32.totalorder %s46, %s49
      %p55 = scmp.eq.s32.totalorder %s10, 0
      %p56 = por %p54, %p55
      %p57 = scmp.ne.s32.totalorder %s46, %s49
      %p58 = scmp.eq.s32.totalorder %s15, 1
      %p59 = por %p57, %p58
      %p60 = scmp.ne.s32.totalorder %s49, %s50
      %p61 = scmp.eq.s32.totalorder %s15, 0
      %p62 = por %p60, %p61
      %p63 = scmp.ne.s32.totalorder %s49, %s50
      %p64 = scmp.eq.s32.totalorder %s16, 1
      %p65 = por %p63, %p64
      %p67 = scmp.ne.s32.totalorder %s50, %s66
      %p68 = scmp.eq.s32.totalorder %s16, 0
      %p69 = por %p67, %p68
      %p70 = scmp.le.s32.totalorder 1, %s10
      %p71 = scmp.lt.s32.totalorder %s10, 3
      %p72 = pnand %p70, %p71
      %p73 = pneg %p72
      // Predicated region
      $region9: #{tpu_custom_call.1} parent=5 // pred_check
        _
      $region10: #{tpu_custom_call.1} parent=5 // pred_check_branch
        %75 = sbr.rel (%p72) target = $region12
      $region11: #{tpu_custom_call.1} parent=5 // pred_region
        %s76 = ssub.s32 %s10, 1
      $region12: #{tpu_custom_call.1} parent=5 // pred_fallthru
        _
      %p77 = scmp.lt.s32.totalorder %s10, 2
      // Predicated region
      $region13: #{tpu_custom_call.1} parent=5 // pred_check
        %p78 = pneg %p77
      $region14: #{tpu_custom_call.1} parent=5 // pred_check_branch
        %80 = sbr.rel (%p78) target = $region16
      $region15: #{tpu_custom_call.1} parent=5 // pred_region
        // Predicated region
        $region17: #{tpu_custom_call.1} parent=15 // pred_check
          %p81 = pneg %p30
        $region18: #{tpu_custom_call.1} parent=15 // pred_check_branch
          %83 = sbr.rel (%p81) target = $region20
        $region19: #{tpu_custom_call.1} parent=15 // pred_region
          %s84 = smul.u32 32, %s10
          %p85 = scmp.lt.s32.totalorder %s84, 63
          %s86 = scalar_select %p85, %s84, 63
          %s87 = smul.addr %s86, 8
          %s88 = scalar_lea.vmem %s0, %s87
          %s89 = smul.u32 32, %s10
        $region20: #{tpu_custom_call.1} parent=15 // pred_fallthru
          _
      $region16: #{tpu_custom_call.1} parent=5 // pred_fallthru
        _
      %p90 = scmp.le.s32.totalorder 1, %s10
      %p91 = scmp.lt.s32.totalorder %s10, 3
      %p92 = pnand %p90, %p91
      %p93 = pneg %p92
      // Predicated region
      $region21: #{tpu_custom_call.1} parent=5 // pred_check
        _
      $region22: #{tpu_custom_call.1} parent=5 // pred_check_branch
        %95 = sbr.rel (%p92) target = $region24
      $region23: #{tpu_custom_call.1} parent=5 // pred_region
        %s96 = ssub.s32 %s10, 1
        %s97 = smul.u32 32, %s15
        %p98 = scmp.lt.s32.totalorder %s97, 63
        %s99 = scalar_select %p98, %s97, 63
        %s100 = smul.addr %s99, 8
        %s101 = scalar_lea.vmem %s0, %s100
        %p102 = pneg %p36
        %p103 = pneg %p33
        %p104 = pneg %p62
        %p105 = pneg %p59
        %s106 = sand.u32 %s49, 1
        %s107 = scalar_lea.sflag [#allocation3], %s106
        %s108 = sand.u32 %s49, 1
        %s109 = smul.addr %s108, 2
        %s110 = scalar_lea.vmem [#allocation2], %s109
        %s111 = smul.u32 32, %s15
        %p112 = scmp.lt.s32.totalorder %s111, 63
        %s113 = scalar_select %p112, %s111, 63
        %s114 = smul.addr %s113, 8
        %s115 = scalar_lea.vmem %s0, %s114
        %s116 = smul.u32 32, %s15
        %v117 = vld [vmem:[%s115] sm:$0xff]
        %v118 = vld [vmem:[%s115 + $0x8] sm:$0xff]
        %v119 = vld [vmem:[%s115 + $0x10] sm:$0xff]
        %v120 = vld [vmem:[%s115 + $0x18] sm:$0xff]
        %v121 = vld [vmem:[%s115 + $0x20] sm:$0xff]
        %v122 = vld [vmem:[%s115 + $0x28] sm:$0xff]
        %v123 = vld [vmem:[%s115 + $0x30] sm:$0xff]
        %v124 = vld [vmem:[%s115 + $0x38] sm:$0xff]
        %v125 = vld [vmem:[%s115 + $0x40] sm:$0xff]
        %v126 = vld [vmem:[%s115 + $0x48] sm:$0xff]
        %v127 = vld [vmem:[%s115 + $0x50] sm:$0xff]
        %v128 = vld [vmem:[%s115 + $0x58] sm:$0xff]
        %v129 = vld [vmem:[%s115 + $0x60] sm:$0xff]
        %v130 = vld [vmem:[%s115 + $0x68] sm:$0xff]
        %v131 = vld [vmem:[%s115 + $0x70] sm:$0xff]
        %v132 = vld [vmem:[%s115 + $0x78] sm:$0xff]
        %v133 = vld [vmem:[%s115 + $0x80] sm:$0xff]
        %v134 = vld [vmem:[%s115 + $0x88] sm:$0xff]
        %v135 = vld [vmem:[%s115 + $0x90] sm:$0xff]
        %v136 = vld [vmem:[%s115 + $0x98] sm:$0xff]
        %v137 = vld [vmem:[%s115 + $0xa0] sm:$0xff]
        %v138 = vld [vmem:[%s115 + $0xa8] sm:$0xff]
        %v139 = vld [vmem:[%s115 + $0xb0] sm:$0xff]
        %v140 = vld [vmem:[%s115 + $0xb8] sm:$0xff]
        %v141 = vld [vmem:[%s115 + $0xc0] sm:$0xff]
        %v142 = vld [vmem:[%s115 + $0xc8] sm:$0xff]
        %v143 = vld [vmem:[%s115 + $0xd0] sm:$0xff]
        %v144 = vld [vmem:[%s115 + $0xd8] sm:$0xff]
        %v145 = vld [vmem:[%s115 + $0xe0] sm:$0xff]
        %v146 = vld [vmem:[%s115 + $0xe8] sm:$0xff]
        %v147 = vld [vmem:[%s115 + $0xf0] sm:$0xff]
        %v148 = vld [vmem:[%s115 + $0xf8] sm:$0xff]
        %vm149 = vcmask 130048
        %v150 = vsel %vm149, %v117, 0.0
        %v151 = vsel %vm149, %v118, 0.0
        %v152 = vadd.f32 %v150, %v151
        %v153 = vsel %vm149, %v119, 0.0
        %v154 = vadd.f32 %v152, %v153
        %v155 = vsel %vm149, %v120, 0.0
        %v156 = vadd.f32 %v154, %v155
        %v157 = vsel %vm149, %v121, 0.0
        %v158 = vadd.f32 %v156, %v157
        %v159 = vsel %vm149, %v122, 0.0
        %v160 = vadd.f32 %v158, %v159
        %v161 = vsel %vm149, %v123, 0.0
        %v162 = vadd.f32 %v160, %v161
        %v163 = vsel %vm149, %v124, 0.0
        %v164 = vadd.f32 %v162, %v163
        %v165 = vsel %vm149, %v125, 0.0
        %v166 = vadd.f32 %v164, %v165
        %v167 = vsel %vm149, %v126, 0.0
        %v168 = vadd.f32 %v166, %v167
        %v169 = vsel %vm149, %v127, 0.0
        %v170 = vadd.f32 %v168, %v169
        %v171 = vsel %vm149, %v128, 0.0
        %v172 = vadd.f32 %v170, %v171
        %v173 = vsel %vm149, %v129, 0.0
        %v174 = vadd.f32 %v172, %v173
        %v175 = vsel %vm149, %v130, 0.0
        %v176 = vadd.f32 %v174, %v175
        %v177 = vsel %vm149, %v131, 0.0
        %v178 = vadd.f32 %v176, %v177
        %v179 = vsel %vm149, %v132, 0.0
        %v180 = vadd.f32 %v178, %v179
        %v181 = vsel %vm149, %v133, 0.0
        %v182 = vadd.f32 %v180, %v181
        %v183 = vsel %vm149, %v134, 0.0
        %v184 = vadd.f32 %v182, %v183
        %v185 = vsel %vm149, %v135, 0.0
        %v186 = vadd.f32 %v184, %v185
        %v187 = vsel %vm149, %v136, 0.0
        %v188 = vadd.f32 %v186, %v187
        %v189 = vsel %vm149, %v137, 0.0
        %v190 = vadd.f32 %v188, %v189
        %v191 = vsel %vm149, %v138, 0.0
        %v192 = vadd.f32 %v190, %v191
        %v193 = vsel %vm149, %v139, 0.0
        %v194 = vadd.f32 %v192, %v193
        %v195 = vsel %vm149, %v140, 0.0
        %v196 = vadd.f32 %v194, %v195
        %v197 = vsel %vm149, %v141, 0.0
        %v198 = vadd.f32 %v196, %v197
        %v199 = vsel %vm149, %v142, 0.0
        %v200 = vadd.f32 %v198, %v199
        %v201 = vsel %vm149, %v143, 0.0
        %v202 = vadd.f32 %v200, %v201
        %v203 = vsel %vm149, %v144, 0.0
        %v204 = vadd.f32 %v202, %v203
        %v205 = vsel %vm149, %v145, 0.0
        %v206 = vadd.f32 %v204, %v205
        %v207 = vsel %vm149, %v146, 0.0
        %v208 = vadd.f32 %v206, %v207
        %v209 = vsel %vm149, %v147, 0.0
        %v210 = vadd.f32 %v208, %v209
        %v211 = vsel %vm149, %v148, 0.0
        %v212 = vadd.f32 %v210, %v211
        %v213 = vrot.slane %v212, 4
        %v214 = vadd.f32 %v212, %v213
        %v215 = vrot.slane %v214, 2
        %v216 = vadd.f32 %v214, %v215
        %v217 = vrot.slane %v216, 1
        %v218 = vadd.f32 %v216, %v217
        %vm219 = vcmask 122880
        %220 = vst.msk [vmem:[%s110] sm:$0x1] %vm219, %v218
        %v221 = vmul.f32 %v117, %v117
        %v222 = vmul.f32 %v118, %v118
        %v223 = vmul.f32 %v119, %v119
        %v224 = vmul.f32 %v120, %v120
        %v225 = vmul.f32 %v121, %v121
        %v226 = vmul.f32 %v122, %v122
        %v227 = vmul.f32 %v123, %v123
        %v228 = vmul.f32 %v124, %v124
        %v229 = vmul.f32 %v125, %v125
        %v230 = vmul.f32 %v126, %v126
        %v231 = vmul.f32 %v127, %v127
        %v232 = vmul.f32 %v128, %v128
        %v233 = vmul.f32 %v129, %v129
        %v234 = vmul.f32 %v130, %v130
        %v235 = vmul.f32 %v131, %v131
        %v236 = vmul.f32 %v132, %v132
        %v237 = vmul.f32 %v133, %v133
        %v238 = vmul.f32 %v134, %v134
        %v239 = vmul.f32 %v135, %v135
        %v240 = vmul.f32 %v136, %v136
        %v241 = vmul.f32 %v137, %v137
        %v242 = vmul.f32 %v138, %v138
        %v243 = vmul.f32 %v139, %v139
        %v244 = vmul.f32 %v140, %v140
        %v245 = vmul.f32 %v141, %v141
        %v246 = vmul.f32 %v142, %v142
        %v247 = vmul.f32 %v143, %v143
        %v248 = vmul.f32 %v144, %v144
        %v249 = vmul.f32 %v145, %v145
        %v250 = vmul.f32 %v146, %v146
        %v251 = vmul.f32 %v147, %v147
        %v252 = vmul.f32 %v148, %v148
        %v253 = vsel %vm149, %v221, 0.0
        %v254 = vsel %vm149, %v222, 0.0
        %v255 = vadd.f32 %v253, %v254
        %v256 = vsel %vm149, %v223, 0.0
        %v257 = vadd.f32 %v255, %v256
        %v258 = vsel %vm149, %v224, 0.0
        %v259 = vadd.f32 %v257, %v258
        %v260 = vsel %vm149, %v225, 0.0
        %v261 = vadd.f32 %v259, %v260
        %v262 = vsel %vm149, %v226, 0.0
        %v263 = vadd.f32 %v261, %v262
        %v264 = vsel %vm149, %v227, 0.0
        %v265 = vadd.f32 %v263, %v264
        %v266 = vsel %vm149, %v228, 0.0
        %v267 = vadd.f32 %v265, %v266
        %v268 = vsel %vm149, %v229, 0.0
        %v269 = vadd.f32 %v267, %v268
        %v270 = vsel %vm149, %v230, 0.0
        %v271 = vadd.f32 %v269, %v270
        %v272 = vsel %vm149, %v231, 0.0
        %v273 = vadd.f32 %v271, %v272
        %v274 = vsel %vm149, %v232, 0.0
        %v275 = vadd.f32 %v273, %v274
        %v276 = vsel %vm149, %v233, 0.0
        %v277 = vadd.f32 %v275, %v276
        %v278 = vsel %vm149, %v234, 0.0
        %v279 = vadd.f32 %v277, %v278
        %v280 = vsel %vm149, %v235, 0.0
        %v281 = vadd.f32 %v279, %v280
        %v282 = vsel %vm149, %v236, 0.0
        %v283 = vadd.f32 %v281, %v282
        %v284 = vsel %vm149, %v237, 0.0
        %v285 = vadd.f32 %v283, %v284
        %v286 = vsel %vm149, %v238, 0.0
        %v287 = vadd.f32 %v285, %v286
        %v288 = vsel %vm149, %v239, 0.0
        %v289 = vadd.f32 %v287, %v288
        %v290 = vsel %vm149, %v240, 0.0
        %v291 = vadd.f32 %v289, %v290
        %v292 = vsel %vm149, %v241, 0.0
        %v293 = vadd.f32 %v291, %v292
        %v294 = vsel %vm149, %v242, 0.0
        %v295 = vadd.f32 %v293, %v294
        %v296 = vsel %vm149, %v243, 0.0
        %v297 = vadd.f32 %v295, %v296
        %v298 = vsel %vm149, %v244, 0.0
        %v299 = vadd.f32 %v297, %v298
        %v300 = vsel %vm149, %v245, 0.0
        %v301 = vadd.f32 %v299, %v300
        %v302 = vsel %vm149, %v246, 0.0
        %v303 = vadd.f32 %v301, %v302
        %v304 = vsel %vm149, %v247, 0.0
        %v305 = vadd.f32 %v303, %v304
        %v306 = vsel %vm149, %v248, 0.0
        %v307 = vadd.f32 %v305, %v306
        %v308 = vsel %vm149, %v249, 0.0
        %v309 = vadd.f32 %v307, %v308
        %v310 = vsel %vm149, %v250, 0.0
        %v311 = vadd.f32 %v309, %v310
        %v312 = vsel %vm149, %v251, 0.0
        %v313 = vadd.f32 %v311, %v312
        %v314 = vsel %vm149, %v252, 0.0
        %v315 = vadd.f32 %v313, %v314
        %v316 = vrot.slane %v315, 4
        %v317 = vadd.f32 %v315, %v316
        %v318 = vrot.slane %v317, 2
        %v319 = vadd.f32 %v317, %v318
        %v320 = vrot.slane %v319, 1
        %v321 = vadd.f32 %v319, %v320
        %322 = vst.msk [vmem:[%s110 + $0x1] sm:$0x1] %vm219, %v321
        %s323 = sand.u32 %s49, 1
        %s324 = scalar_lea.sflag [#allocation3], %s323
        %s325 = sand.u32 %s49, 1
        %s326 = smul.addr %s325, 2
        %s327 = scalar_lea.vmem [#allocation2], %s326
        // Predicated region
        $region25: #{tpu_custom_call.1} parent=23 // pred_check
          %p328 = pneg %p59
        $region26: #{tpu_custom_call.1} parent=23 // pred_check_branch
          %330 = sbr.rel (%p328) target = $region28
        $region27: #{tpu_custom_call.1} parent=23 // pred_region
          %s332 = ssub.s32 32, 32
          %333 = vsyncadd %s324, %s332
          %s334 = smul.addr %s15, 32
          %s335 = scalar_lea.hbm %s1, %s334
          %s337 = sshll.u32 %s327, 4
          %s338 = int_to_ptr.vmem [resolvable:$true] %s337
          %340 = dma.vmem_to_hbm [thread:$0]  %s338, 32, %s335, %s324
        $region28: #{tpu_custom_call.1} parent=23 // pred_fallthru
          _
      $region24: #{tpu_custom_call.1} parent=5 // pred_fallthru
        _
      %p341 = scmp.le.s32.totalorder 2, %s10
      // Predicated region
      $region29: #{tpu_custom_call.1} parent=5 // pred_check
        %p342 = pneg %p341
      $region30: #{tpu_custom_call.1} parent=5 // pred_check_branch
        %344 = sbr.rel (%p342) target = $region32
      $region31: #{tpu_custom_call.1} parent=5 // pred_region
        %s345 = ssub.s32 %s10, 2
        // Predicated region
        $region33: #{tpu_custom_call.1} parent=31 // pred_check
          %p346 = pneg %p65
        $region34: #{tpu_custom_call.1} parent=31 // pred_check_branch
          %348 = sbr.rel (%p346) target = $region36
        $region35: #{tpu_custom_call.1} parent=31 // pred_region
          %s349 = sand.u32 %s50, 1
          %s350 = scalar_lea.sflag [#allocation3], %s349
          %s351 = sand.u32 %s50, 1
          %s352 = smul.addr %s351, 2
          %s353 = scalar_lea.vmem [#allocation2], %s352
          %354 = dma.done %s350, 32
        $region36: #{tpu_custom_call.1} parent=31 // pred_fallthru
          _
      $region32: #{tpu_custom_call.1} parent=5 // pred_fallthru
        _
    $region6: #{tpu_custom_call.1} parent=1 // loop_footer
      %s14 = sadd.s32 1, %s10
    $region7: #{tpu_custom_call.1} parent=1 // loop_footer_branch
      %9 = sbr.rel target = $region3
    $region8: #{tpu_custom_call.1} parent=1 // loop_exit
      _
    %355 = vsyncpa [#allocation3], 1
    %s356 = scalar_lea.sflag [#allocation3], 1
    %357 = vsyncpa %s356, 1

</llo_original>
